<compile_context>
chip_gen: v7x
topology: tpu7x:2x2x1
jax: 0.10.0
libtpu: 0.0.40
codegen_flags: <defaults>
</compile_context>

<pallas_src>
import jax
import jax.numpy as jnp
from jax import lax
from jax.experimental import pallas as pl
from jax.experimental.pallas import tpu as pltpu

MIN_VALUE = 0.0
MAX_VALUE = 100.0


def linear_clamp_kernel(x_ref, w_ref, b_ref, o_ref):
    # x_ref: (B, K); w_ref: (N, K) -- PyTorch Linear layout, untouched;
    # b_ref: (1, N)
    x = x_ref[...]
    w = w_ref[...]
    b = b_ref[...]
    # y = x @ W^T + b, contracting dim 1 of both operands directly on the MXU
    # (no in-kernel or wrapper-side transpose op exists at all).
    y = lax.dot_general(
        x, w,
        dimension_numbers=(((1,), (1,)), ((), ())),
        preferred_element_type=jnp.float32,
    )
    y = jnp.clip(y + b, MIN_VALUE, MAX_VALUE)
    o_ref[...] = y.astype(o_ref.dtype)


@jax.jit
def linear_clamp(x, weight, bias):
    # weight: (out_features, in_features) = (N, K), exactly as PyTorch stores it.
    B, K = x.shape
    N = weight.shape[0]
    bias2d = bias.reshape(1, N)  # metadata-only inside this jit

    vmem = pl.BlockSpec(memory_space=pltpu.MemorySpace.VMEM)
    cost = pl.CostEstimate(
        flops=2 * B * K * N,
        transcendentals=0,
        bytes_accessed=4 * (B * K + K * N + N + B * N),
    )
    return pl.pallas_call(
        linear_clamp_kernel,
        out_shape=jax.ShapeDtypeStruct((B, N), x.dtype),
        in_specs=[vmem, vmem, vmem],
        out_specs=vmem,
        cost_estimate=cost,
    )(x, weight, bias2d)


if __name__ == "__main__":
    key = jax.random.PRNGKey(0)
    kx, kw, kb = jax.random.split(key, 3)

    # Input matching x1 = torch.randn(1, 8)
    x1 = jax.random.normal(kx, (1, 8), dtype=jnp.float32)

    # Deterministic Linear(8, 8) parameters (PyTorch-style uniform init bound),
    # kept in PyTorch's native (out_features, in_features) layout.
    bound = 1.0 / jnp.sqrt(8.0)
    weight = jax.random.uniform(kw, (8, 8), minval=-bound, maxval=bound,
                                dtype=jnp.float32)
    bias = jax.random.uniform(kb, (8,), minval=-bound, maxval=bound,
                              dtype=jnp.float32)

    out = linear_clamp(x1, weight, bias)
    out = jax.block_until_ready(out)

    # Reference check in plain JAX (PyTorch semantics: x @ W^T + b, clamp).
    ref = jnp.clip(x1 @ weight.T + bias, MIN_VALUE, MAX_VALUE)
    assert out.shape == (1, 8)
    assert jnp.allclose(out, ref, atol=1e-5, rtol=1e-5)

    print("KERNEL_OK")
</pallas_src>

<mosaic_0001>
module attributes {stable_mosaic.version = 11 : i64} {
  func.func @linear_clamp_kernel(%arg0: memref<1x8xf32, #tpu.memory_space<vmem>>, %arg1: memref<8x8xf32, #tpu.memory_space<vmem>>, %arg2: memref<1x8xf32, #tpu.memory_space<vmem>>, %arg3: memref<1x8xf32, #tpu.memory_space<vmem>>) attributes {dimension_semantics = [], scalar_prefetch = 0 : i64, scratch_operands = 0 : i64, tpu.core_type = #tpu.core_type<tc>} {
    %c0 = arith.constant 0 : index
    %c0_0 = arith.constant 0 : index
    %0 = vector.load %arg0[%c0, %c0_0] : memref<1x8xf32, #tpu.memory_space<vmem>>, vector<1x8xf32>
    %c0_1 = arith.constant 0 : index
    %c0_2 = arith.constant 0 : index
    %1 = vector.load %arg1[%c0_1, %c0_2] : memref<8x8xf32, #tpu.memory_space<vmem>>, vector<8x8xf32>
    %c0_3 = arith.constant 0 : index
    %c0_4 = arith.constant 0 : index
    %2 = vector.load %arg2[%c0_3, %c0_4] : memref<1x8xf32, #tpu.memory_space<vmem>>, vector<1x8xf32>
    %cst = arith.constant dense<0.000000e+00> : vector<1x8xf32>
    %3 = tpu.matmul %0, %1, %cst {dimension_numbers = #tpu.dot_dimension_numbers<[1], [1], [0], [0], [0, 0, 1, 0], [], []>} : vector<1x8xf32>, vector<8x8xf32>, vector<1x8xf32> -> vector<1x8xf32>
    %4 = arith.addf %3, %2 : vector<1x8xf32>
    %cst_5 = arith.constant 0.000000e+00 : f32
    %cst_6 = arith.constant 1.000000e+02 : f32
    %5 = vector.broadcast %cst_5 : f32 to vector<1x8xf32>
    %6 = arith.maximumf %5, %4 : vector<1x8xf32>
    %7 = vector.broadcast %cst_6 : f32 to vector<1x8xf32>
    %8 = arith.minimumf %7, %6 : vector<1x8xf32>
    %c0_7 = arith.constant 0 : index
    %c0_8 = arith.constant 0 : index
    %9 = vector.load %arg3[%c0_7, %c0_8] : memref<1x8xf32, #tpu.memory_space<vmem>>, vector<1x8xf32>
    tpu.vector_store %arg3[%c0_7, %c0_8], %8 {strides = array<i32>} : memref<1x8xf32, #tpu.memory_space<vmem>>, vector<1x8xf32>,
    return
  }
}

</mosaic_0001>

<llo_original>
// kernel: linear_clamp.1
$region0: #{linear_clamp.1}
  #allocation0 [shape = 'u32[]', space=smem, size = 0x4, offset = 0x4, fixed_abs, tag = 'smem constant byte address 0x4 - core index']
  #allocation1 [shape = 'u32[144,128]{1,0:T(1,128)}', space=vmem, size = 0x12000, scoped, tag = 'internal scratch']
  %s0 = inlined_call_operand.vmem [shape: f32[1,8], index: 0, kind: input, shape index: {}]
  %s1 = inlined_call_operand.hbm [shape: f32[8,8], index: 1, kind: input, shape index: {}]
  %s2 = inlined_call_operand.vmem [shape: f32[1,8], index: 2, kind: input, shape index: {}]
  %s3 = inlined_call_operand.hbm [shape: f32[1,8], index: 3, kind: output, shape index: {}]
  %s4 = sld [smem:[#allocation0]]
  $region26: #{linear_clamp.1} parent=0
    _
  %s6 = ssub.s32 1, %s4
  %s7 = scalar_select 0, %s6, %s4
  $region1: #{linear_clamp.1} parent=0
    #allocation2 [shape = 'u8[4096]{0}', space=vmem, size = 0x1000, scoped, tag = 'input window, operand 1, single buffered']
    #allocation3 [shape = 's32[1]{0}', space=sflag, size = 0x4, scoped, tag = 'scoped memory for linear_clamp.1']
    #allocation4 [shape = 's32[1]{0}', space=sflag, size = 0x4, scoped, tag = 'scoped memory for linear_clamp.1']
    #allocation5 [shape = 'u8[512]{0}', space=vmem, size = 0x400, scoped, tag = 'output window, operand 0, single buffered']
    %8 = vsyncpa [#allocation3], 0
    %9 = vsyncpa [#allocation4], 0
    // Predicated region
    $region2: #{linear_clamp.1} parent=1 // pred_check
      _
    $region3: #{linear_clamp.1} parent=1 // pred_check_branch
      %11 = sbr.rel (0) target = $region5
    $region4: #{linear_clamp.1} parent=1 // pred_region
      _
    $region5: #{linear_clamp.1} parent=1 // pred_fallthru
      _
    // Predicated region
    $region6: #{linear_clamp.1} parent=1 // pred_check
      _
    $region7: #{linear_clamp.1} parent=1 // pred_check_branch
      %13 = sbr.rel (0) target = $region9
    $region8: #{linear_clamp.1} parent=1 // pred_region
      %s15 = ssub.s32 128, 128
      %16 = vsyncadd [#allocation3], %s15
      %s18 = sshll.u32 [#allocation2], 4
      %s19 = int_to_ptr.vmem [resolvable:$true] %s18
      %21 = dma.hbm_to_vmem [thread:$0]  %s1, 128, %s19, [#allocation3]
    $region9: #{linear_clamp.1} parent=1 // pred_fallthru
      _
    // Predicated region
    $region10: #{linear_clamp.1} parent=1 // pred_check
      _
    $region11: #{linear_clamp.1} parent=1 // pred_check_branch
      %23 = sbr.rel (0) target = $region13
    $region12: #{linear_clamp.1} parent=1 // pred_region
      _
    $region13: #{linear_clamp.1} parent=1 // pred_fallthru
      _
    // Predicated region
    $region14: #{linear_clamp.1} parent=1 // pred_check
      _
    $region15: #{linear_clamp.1} parent=1 // pred_check_branch
      %25 = sbr.rel (0) target = $region17
    $region16: #{linear_clamp.1} parent=1 // pred_region
      %26 = dma.done [#allocation3], 128
    $region17: #{linear_clamp.1} parent=1 // pred_fallthru
      _
    %v27 = vld [vmem:[%s0] sm:$0x1]
    %v28 = vld [vmem:[#allocation2] sm:$0xff]
    %v29 = vld [vmem:[%s2] sm:$0x1]
    %vm30 = vcmask 64512
    %v32 = vsel %vm30, %v27, 0
    %v35 = vsel %vm30, %v28, 0
    %37 = vmatprep.subr.mxu0 0.0
    %38 = vmatpush1.xpose.msra.mxu0 %v35
    %39 = vmatprep.subr.mxu0 0.0
    %40 = vmatpush1.xpose.msra.mxu0 0.0
    %41 = vmatprep.subr.mxu0 0.0
    %42 = vmatpush1.xpose.msra.mxu0 0.0
    %43 = vmatprep.subr.mxu0 0.0
    %44 = vmatpush1.xpose.msra.mxu0 0.0
    %45 = vmatprep.subr.mxu0 0.0
    %46 = vmatpush1.xpose.msra.mxu0 0.0
    %47 = vmatprep.subr.mxu0 0.0
    %48 = vmatpush1.xpose.msra.mxu0 0.0
    %49 = vmatprep.subr.mxu0 0.0
    %50 = vmatpush1.xpose.msra.mxu0 0.0
    %51 = vmatprep.subr.mxu0 0.0
    %52 = vmatpush1.xpose.msra.mxu0 0.0
    %53 = vmatprep.subr.mxu0 0.0
    %54 = vmatpush1.xpose.msra.mxu0 0.0
    %55 = vmatprep.subr.mxu0 0.0
    %56 = vmatpush1.xpose.msra.mxu0 0.0
    %57 = vmatprep.subr.mxu0 0.0
    %58 = vmatpush1.xpose.msra.mxu0 0.0
    %59 = vmatprep.subr.mxu0 0.0
    %60 = vmatpush1.xpose.msra.mxu0 0.0
    %61 = vmatprep.subr.mxu0 0.0
    %62 = vmatpush1.xpose.msra.mxu0 0.0
    %63 = vmatprep.subr.mxu0 0.0
    %64 = vmatpush1.xpose.msra.mxu0 0.0
    %65 = vmatprep.subr.mxu0 0.0
    %66 = vmatpush1.xpose.msra.mxu0 0.0
    %67 = vmatprep.subr.mxu0 0.0
    %68 = vmatpush1.xpose.msra.mxu0 0.0
    %69 = vmatprep.subr.mxu0 0.0
    %70 = vmatpush1.xpose.msra.mxu0 0.0
    %71 = vmatprep.subr.mxu0 0.0
    %72 = vmatpush1.xpose.msra.mxu0 0.0
    %73 = vmatprep.subr.mxu0 0.0
    %74 = vmatpush1.xpose.msra.mxu0 0.0
    %75 = vmatprep.subr.mxu0 0.0
    %76 = vmatpush1.xpose.msra.mxu0 0.0
    %77 = vmatprep.subr.mxu0 0.0
    %78 = vmatpush1.xpose.msra.mxu0 0.0
    %79 = vmatprep.subr.mxu0 0.0
    %80 = vmatpush1.xpose.msra.mxu0 0.0
    %81 = vmatprep.subr.mxu0 0.0
    %82 = vmatpush1.xpose.msra.mxu0 0.0
    %83 = vmatprep.subr.mxu0 0.0
    %84 = vmatpush1.xpose.msra.mxu0 0.0
    %85 = vmatprep.subr.mxu0 0.0
    %86 = vmatpush1.xpose.msra.mxu0 0.0
    %87 = vmatprep.subr.mxu0 0.0
    %88 = vmatpush1.xpose.msra.mxu0 0.0
    %89 = vmatprep.subr.mxu0 0.0
    %90 = vmatpush1.xpose.msra.mxu0 0.0
    %91 = vmatprep.subr.mxu0 0.0
    %92 = vmatpush1.xpose.msra.mxu0 0.0
    %93 = vmatprep.subr.mxu0 0.0
    %94 = vmatpush1.xpose.msra.mxu0 0.0
    %95 = vmatprep.subr.mxu0 0.0
    %96 = vmatpush1.xpose.msra.mxu0 0.0
    %97 = vmatprep.subr.mxu0 0.0
    %98 = vmatpush1.xpose.msra.mxu0 0.0
    %99 = vmatprep.subr.mxu0 0.0
    %100 = vmatpush1.xpose.msra.mxu0 0.0
    %101 = vmatprep.mubr.f32.mxu0 0.0
    %102 = vmatmul.mubr.f32.gmra.mrb[0].mxu0 %v32
    %v103 = vpop.f32.mrb[0].mxu0
    %v104 = vadd.f32 %v29, %v103
    %v105 = vpop.f32.mrb[0].mxu0
    %106 = vdwg.mxu0
    %v107 = vmax.f32 %v104, 0.0
    %v108 = vmin.f32 %v107, 100.0
    %vm109 = vcmask 57344
    %110 = vst.msk [vmem:[#allocation5] sm:$0x1] %vm109, %v108
    // Predicated region
    $region18: #{linear_clamp.1} parent=1 // pred_check
      _
    $region19: #{linear_clamp.1} parent=1 // pred_check_branch
      %112 = sbr.rel (0) target = $region21
    $region20: #{linear_clamp.1} parent=1 // pred_region
      %s114 = ssub.s32 16, 16
      %115 = vsyncadd [#allocation4], %s114
      %s117 = sshll.u32 [#allocation5], 4
      %s118 = int_to_ptr.vmem [resolvable:$true] %s117
      %120 = dma.vmem_to_hbm [thread:$0]  %s118, 16, %s3, [#allocation4]
    $region21: #{linear_clamp.1} parent=1 // pred_fallthru
      _
    // Predicated region
    $region22: #{linear_clamp.1} parent=1 // pred_check
      _
    $region23: #{linear_clamp.1} parent=1 // pred_check_branch
      %122 = sbr.rel (0) target = $region25
    $region24: #{linear_clamp.1} parent=1 // pred_region
      %123 = dma.done [#allocation4], 16
    $region25: #{linear_clamp.1} parent=1 // pred_fallthru
      _
    %124 = vsyncpa [#allocation3], 1
    %125 = vsyncpa [#allocation4], 1

</llo_original>
